<compile_context>
chip_gen: v7x
topology: tpu7x:2x2x1
jax: 0.10.0
libtpu: 0.0.40
codegen_flags: <defaults>
</compile_context>

<pallas_src>
import jax
import jax.numpy as jnp
from jax.experimental import pallas as pl
from jax.experimental.pallas import tpu as pltpu


def _sumsq_kernel(theta_ref, out_ref):
    # theta_ref: (2,) f32 in SMEM, out_ref: (1,) f32 in SMEM — pure scalar-core math.
    t0 = theta_ref[0]
    t1 = theta_ref[1]
    out_ref[0] = t0 * t0 + t1 * t1


def dummy_model00_forward(theta):
    """theta: (2,) float array -> 0-d float32 scalar: theta[0]**2 + theta[1]**2."""
    if theta.dtype != jnp.float32:
        theta = theta.astype(jnp.float32)
    out = pl.pallas_call(
        _sumsq_kernel,
        out_shape=jax.ShapeDtypeStruct((1,), jnp.float32),
        in_specs=[pl.BlockSpec(memory_space=pltpu.MemorySpace.SMEM)],
        out_specs=pl.BlockSpec(memory_space=pltpu.MemorySpace.SMEM),
    )(theta)
    return out[0]


if __name__ == "__main__":
    key = jax.random.PRNGKey(0)
    # Deterministic parameter init matching the module: uniform(-1, 1, size=(2,))
    theta = jax.random.uniform(key, (2,), minval=-1.0, maxval=1.0,
                               dtype=jnp.float32)

    loss = dummy_model00_forward(theta)
    jax.block_until_ready(loss)

    # Reference check in plain JAX
    ref = theta[0] ** 2 + theta[1] ** 2
    assert jnp.allclose(loss, ref, rtol=1e-6, atol=1e-6), (loss, ref)

    print("KERNEL_OK")
</pallas_src>

<mosaic_0001>
module attributes {stable_mosaic.version = 11 : i64} {
  func.func @_sumsq_kernel(%arg0: memref<2xf32, #tpu.memory_space<smem>>, %arg1: memref<1xf32, #tpu.memory_space<smem>>) attributes {dimension_semantics = [], scalar_prefetch = 0 : i64, scratch_operands = 0 : i64, tpu.core_type = #tpu.core_type<tc>} {
    %c0 = arith.constant 0 : index
    %0 = memref.load %arg0[%c0] : memref<2xf32, #tpu.memory_space<smem>>
    %c1 = arith.constant 1 : index
    %1 = memref.load %arg0[%c1] : memref<2xf32, #tpu.memory_space<smem>>
    %2 = arith.mulf %0, %0 : f32
    %3 = arith.mulf %1, %1 : f32
    %4 = arith.addf %2, %3 : f32
    %c0_0 = arith.constant 0 : index
    %5 = memref.load %arg1[%c0_0] : memref<1xf32, #tpu.memory_space<smem>>
    memref.store %4, %arg1[%c0_0] : memref<1xf32, #tpu.memory_space<smem>>
    return
  }
}

</mosaic_0001>

<llo_original>
// kernel: tpu_custom_call.1
$region0: #{tpu_custom_call.1}
  #allocation0 [shape = 'u32[]', space=smem, size = 0x4, offset = 0x4, fixed_abs, tag = 'smem constant byte address 0x4 - core index']
  #allocation1 [shape = 'u32[144,128]{1,0:T(1,128)}', space=vmem, size = 0x12000, scoped, tag = 'internal scratch']
  %s0 = inlined_call_operand.hbm [shape: f32[2], index: 0, kind: input, shape index: {}]
  %s1 = inlined_call_operand.hbm [shape: f32[1], index: 1, kind: output, shape index: {}]
  %s2 = sld [smem:[#allocation0]]
  $region18: #{tpu_custom_call.1} parent=0
    _
  %s4 = ssub.s32 1, %s2
  %s5 = scalar_select 0, %s4, %s2
  $region1: #{tpu_custom_call.1} parent=0
    #allocation2 [shape = 'u8[512]{0}', space=smem, size = 0x200, scoped, tag = 'input window, operand 0, single buffered']
    #allocation3 [shape = 's32[1]{0}', space=sflag, size = 0x4, scoped, tag = 'scoped memory for tpu_custom_call.1']
    #allocation4 [shape = 's32[1]{0}', space=sflag, size = 0x4, scoped, tag = 'scoped memory for tpu_custom_call.1']
    #allocation5 [shape = 'u8[512]{0}', space=smem, size = 0x200, scoped, tag = 'output window, operand 0, single buffered']
    %6 = vsyncpa [#allocation3], 0
    %7 = vsyncpa [#allocation4], 0
    // Predicated region
    $region2: #{tpu_custom_call.1} parent=1 // pred_check
      _
    $region3: #{tpu_custom_call.1} parent=1 // pred_check_branch
      %9 = sbr.rel (0) target = $region5
    $region4: #{tpu_custom_call.1} parent=1 // pred_region
      %s11 = ssub.s32 16, 16
      %12 = vsyncadd [#allocation3], %s11
      %15 = dma.hbm_to_smem %s0, 16, [#allocation2], [#allocation3]
    $region5: #{tpu_custom_call.1} parent=1 // pred_fallthru
      _
    // Predicated region
    $region6: #{tpu_custom_call.1} parent=1 // pred_check
      _
    $region7: #{tpu_custom_call.1} parent=1 // pred_check_branch
      %17 = sbr.rel (0) target = $region9
    $region8: #{tpu_custom_call.1} parent=1 // pred_region
      %18 = dma.done [#allocation3], 16
    $region9: #{tpu_custom_call.1} parent=1 // pred_fallthru
      _
    %19 = sfence
    %s20 = sld [smem:[#allocation2]]
    %s21 = sld [smem:[#allocation2 + $0x1]]
    %s22 = smul.f32 %s20, %s20
    %s23 = smul.f32 %s21, %s21
    %s24 = sadd.f32 %s22, %s23
    %s25 = scalar_lea.smem [#allocation5], 0
    %26 = sst [smem:[%s25]] %s24
    // Predicated region
    $region10: #{tpu_custom_call.1} parent=1 // pred_check
      _
    $region11: #{tpu_custom_call.1} parent=1 // pred_check_branch
      %28 = sbr.rel (0) target = $region13
    $region12: #{tpu_custom_call.1} parent=1 // pred_region
      %s30 = ssub.s32 16, 16
      %31 = vsyncadd [#allocation4], %s30
      %34 = dma.smem_to_hbm [#allocation5], 16, %s1, [#allocation4]
    $region13: #{tpu_custom_call.1} parent=1 // pred_fallthru
      _
    // Predicated region
    $region14: #{tpu_custom_call.1} parent=1 // pred_check
      _
    $region15: #{tpu_custom_call.1} parent=1 // pred_check_branch
      %36 = sbr.rel (0) target = $region17
    $region16: #{tpu_custom_call.1} parent=1 // pred_region
      %37 = dma.done [#allocation4], 16
    $region17: #{tpu_custom_call.1} parent=1 // pred_fallthru
      _
    %38 = sfence
    %39 = vsyncpa [#allocation3], 1
    %40 = vsyncpa [#allocation4], 1

</llo_original>
